<compile_context>
chip_gen: v5e
topology: v5e:2x2
jax: 0.10.0
libtpu: 0.0.40
codegen_flags: <defaults>
</compile_context>

<pallas_src>
import jax
import jax.numpy as jnp
from jax.experimental import pallas as pl
from jax.experimental.pallas import tpu as pltpu


# ---------------------------------------------------------------------------
# Kernels
# ---------------------------------------------------------------------------

def _integrator_tiled_kernel(x_ref, w_ref, b_ref, o_ref):
    # x_ref: (C, tileP)   w_ref: (F, C)   b_ref: (F, 1)   o_ref: (F, tileP)
    x = jnp.maximum(x_ref[...], 0.0)                                   # ReLU (VPU)
    # NOTE: if C grows large and tiles are huge, casting w/x to bf16 here
    # (keeping the f32 accumulate) cuts MXU pushes ~3x; with current shapes the
    # MXU is fully hidden under HBM DMA, so operands stay in the I/O dtype.
    y = jnp.dot(w_ref[...], x, preferred_element_type=jnp.float32)     # MXU, K=C
    o_ref[...] = (y + b_ref[...]).astype(o_ref.dtype)                  # bias bcast over lanes


def _integrator_small_kernel(x_ref, w_ref, b_ref, o_ref):
    # Whole problem in a single grid step (tiny inputs / H*W < 128).
    # x_ref: (N, C, P)   w_ref: (F, C)   b_ref: (F, 1)   o_ref: (N, F, P)
    w = w_ref[...]
    b = b_ref[...]
    for n in range(x_ref.shape[0]):            # static, tiny trip count
        xn = jnp.maximum(x_ref[n], 0.0)                                # (C, P)
        yn = jnp.dot(w, xn, preferred_element_type=jnp.float32)        # (F, P)
        o_ref[n] = (yn + b).astype(o_ref.dtype)


# ---------------------------------------------------------------------------
# Wrapper
# ---------------------------------------------------------------------------

def _vmem_budgets():
    """Per-generation budgets: (block_budget, vmem_limit, target_pixels)."""
    try:
        cap = pltpu.get_tpu_info().vmem_capacity_bytes
    except Exception:  # unknown chip / query unsupported -> conservative (v7x-sized)
        cap = 64 << 20
    if cap >= (96 << 20):
        # v5e / v6e: 128 MiB physical VMEM -> go big, amortize ~0.35 us/step.
        return 40 << 20, 80 << 20, 128 * 1024
    # v7x: 64 MiB physical per TC -> keep double-buffered blocks ~20 MiB.
    return 20 << 20, 44 << 20, 64 * 1024


def integrator_forward(x_nchw, weight, bias, *, pixel_tile=None):
    """x_nchw: (N, C, H, W); weight: (F, C) [1x1 conv kernel squeezed]; bias: (F,)."""
    N, C, H, W = x_nchw.shape
    F = weight.shape[0]
    P = H * W
    itemsize = x_nchw.dtype.itemsize

    # NCHW -> (N, C, P): pure reshape, no transpose / extra HBM pass.
    x = x_nchw.reshape(N, C, P)
    w = weight.astype(x_nchw.dtype)            # bf16 I/O path: operands match x dtype
    b = bias.astype(jnp.float32).reshape(F, 1)  # bias added in f32, cast on store

    io_bytes = N * P * (C + F) * itemsize
    cost = pl.CostEstimate(
        flops=2 * N * P * C * F,
        transcendentals=0,
        bytes_accessed=io_bytes + w.size * w.dtype.itemsize + F * 4,
    )

    block_budget, vmem_limit, target_pixels = _vmem_budgets()

    # --- small-problem / small-feature-map path: ONE grid step ---------------
    # Per-step pipeline overhead (~0.35 us) plus pallas_call fixed cost dominate
    # tiny problems; and for P < 128 a tiled lane dim would force masked stores.
    # Full-array blocks are always legal wrt the (8, 128) constraint.
    if pixel_tile is None and (io_bytes <= (2 << 20) or P < 128) and io_bytes <= block_budget:
        y = pl.pallas_call(
            _integrator_small_kernel,
            out_shape=jax.ShapeDtypeStruct((N, F, P), x_nchw.dtype),
            grid_spec=pltpu.PrefetchScalarGridSpec(
                num_scalar_prefetch=0,
                grid=(1,),
                in_specs=[
                    pl.BlockSpec((N, C, P), lambda i: (0, 0, 0)),
                    pl.BlockSpec((F, C), lambda i: (0, 0)),
                    pl.BlockSpec((F, 1), lambda i: (0, 0)),
                ],
                out_specs=pl.BlockSpec((N, F, P), lambda i: (0, 0, 0)),
            ),
            compiler_params=pltpu.CompilerParams(
                dimension_semantics=("arbitrary",),
                vmem_limit_bytes=vmem_limit,
            ),
            cost_estimate=cost,
        )(x, w, b)
        return y.reshape(N, F, H, W)

    # --- tiled (large) path ---------------------------------------------------
    if pixel_tile is None:
        bytes_per_pixel = (C + F) * itemsize             # one input + one output column
        max_tile = max(128, block_budget // (2 * bytes_per_pixel))  # 2x double-buffer
        pixel_tile = min(target_pixels, max_tile)
        pixel_tile = max(128, (pixel_tile // 128) * 128)             # lane-aligned
    pixel_tile = min(pixel_tile, P)
    if pixel_tile < P:
        # partial-coverage tiles must keep the lane dim a multiple of 128
        pixel_tile = max(128, (pixel_tile // 128) * 128)

    # Guarantee >= 2 grid steps so both v7x TensorCores get work.
    if N * pl.cdiv(P, pixel_tile) < 2 and P >= 256:
        pixel_tile = max(128, (pl.cdiv(P, 2) // 128) * 128)

    num_p_tiles = pl.cdiv(P, pixel_tile)
    grid = (N, num_p_tiles)

    y = pl.pallas_call(
        _integrator_tiled_kernel,
        out_shape=jax.ShapeDtypeStruct((N, F, P), x_nchw.dtype),
        grid_spec=pltpu.PrefetchScalarGridSpec(
            num_scalar_prefetch=0,
            grid=grid,
            in_specs=[
                # per-image, per-pixel-tile slab of the input: (C, tileP)
                pl.BlockSpec((None, C, pixel_tile), lambda n, p: (n, 0, p)),
                # weight, resident across the whole grid
                pl.BlockSpec((F, C), lambda n, p: (0, 0)),
                # bias, resident
                pl.BlockSpec((F, 1), lambda n, p: (0, 0)),
            ],
            out_specs=pl.BlockSpec((None, F, pixel_tile), lambda n, p: (n, 0, p)),
        ),
        compiler_params=pltpu.CompilerParams(
            dimension_semantics=("parallel", "parallel"),
            vmem_limit_bytes=vmem_limit,
        ),
        cost_estimate=cost,
    )(x, w, b)

    # (N, F, P) -> (N, F, H, W): pure reshape, already NCHW.
    return y.reshape(N, F, H, W)


# ---------------------------------------------------------------------------
# Init + reference
# ---------------------------------------------------------------------------

def orthogonal(key, shape, gain=1.0, dtype=jnp.float32):
    """Orthogonal init matching torch.nn.init.orthogonal_ for a 2-D weight."""
    rows, cols = shape
    flat = jax.random.normal(key, (max(rows, cols), min(rows, cols)), dtype=jnp.float32)
    q, r = jnp.linalg.qr(flat)
    d = jnp.sign(jnp.diag(r))          # sign correction so decomposition is unique
    q = q * d[None, :]
    if rows < cols:
        q = q.T
    return (gain * q[:rows, :cols]).astype(dtype)


def reference_forward(x_nchw, weight, bias):
    # Pure-JAX reference of Conv2d(1x1)(ReLU(x)) for correctness check.
    x = jnp.maximum(x_nchw, 0.0)
    return jnp.einsum("nchw,fc->nfhw", x, weight) + bias[None, :, None, None]


if __name__ == "__main__":
    # Module config: in_shape_1=(4,16,16), in_shape_2=(4,16,16), concatenate=True
    in_c1, in_c2 = 4, 4
    num_filters = 32
    C_in = in_c1 + in_c2           # 8
    N, H, W = 2, 16, 16

    key = jax.random.PRNGKey(0)
    k_x, k_w = jax.random.split(key)

    # Input x: already-concatenated feature map (N, C_in, H, W)
    x = jax.random.normal(k_x, (N, C_in, H, W), dtype=jnp.float32)

    # Conv2d(C_in, num_filters, (1,1)) parameters:
    #   weight (num_filters, C_in, 1, 1) -> orthogonal with relu gain sqrt(2)
    #   bias   (num_filters,)            -> zeros
    gain = jnp.sqrt(2.0)
    weight = orthogonal(k_w, (num_filters, C_in), gain=gain)   # (F, C_in)
    bias = jnp.zeros((num_filters,), dtype=jnp.float32)

    y = integrator_forward(x, weight, bias)
    y = jax.block_until_ready(y)

    y_ref = reference_forward(x, weight, bias)
    assert y.shape == (N, num_filters, H, W)
    assert jnp.allclose(y, y_ref, atol=1e-5, rtol=1e-5), "mismatch vs reference"

    # Also exercise the tiled path (forced small pixel_tile) for coverage.
    y_tiled = jax.block_until_ready(integrator_forward(x, weight, bias, pixel_tile=128))
    assert jnp.allclose(y_tiled, y_ref, atol=1e-5, rtol=1e-5), "tiled path mismatch"

    print("KERNEL_OK")
</pallas_src>

<mosaic_0001>
module attributes {stable_mosaic.version = 11 : i64} {
  func.func @_integrator_small_kernel(%arg0: i32, %arg1: memref<2x8x256xf32, #tpu.memory_space<vmem>>, %arg2: memref<32x8xf32, #tpu.memory_space<vmem>>, %arg3: memref<32x1xf32, #tpu.memory_space<vmem>>, %arg4: memref<2x32x256xf32, #tpu.memory_space<vmem>>) attributes {dimension_semantics = [#tpu.dimension_semantics<arbitrary>], iteration_bounds = array<i64: 1>, scalar_prefetch = 0 : i64, scratch_operands = 0 : i64, tpu.core_type = #tpu.core_type<tc>, window_params = [{pipeline_mode = #tpu.pipeline_mode<synchronous>, transform_indices = @transform_0, window_bounds = array<i64: 2, 8, 256>}, {pipeline_mode = #tpu.pipeline_mode<synchronous>, transform_indices = @transform_1, window_bounds = array<i64: 32, 8>}, {pipeline_mode = #tpu.pipeline_mode<synchronous>, transform_indices = @transform_2, window_bounds = array<i64: 32, 1>}, {pipeline_mode = #tpu.pipeline_mode<synchronous>, transform_indices = @transform_3, window_bounds = array<i64: 2, 32, 256>}]} {
    %c0 = arith.constant 0 : index
    %c0_0 = arith.constant 0 : index
    %0 = vector.load %arg2[%c0, %c0_0] : memref<32x8xf32, #tpu.memory_space<vmem>>, vector<32x8xf32>
    %c0_1 = arith.constant 0 : index
    %c0_2 = arith.constant 0 : index
    %1 = vector.load %arg3[%c0_1, %c0_2] : memref<32x1xf32, #tpu.memory_space<vmem>>, vector<32x1xf32>
    %c0_3 = arith.constant 0 : index
    %c0_4 = arith.constant 0 : index
    %c0_5 = arith.constant 0 : index
    %2 = vector.load %arg1[%c0_3, %c0_4, %c0_5] : memref<2x8x256xf32, #tpu.memory_space<vmem>>, vector<1x8x256xf32>
    %3 = vector.shape_cast %2 : vector<1x8x256xf32> to vector<8x256xf32>
    %cst = arith.constant 0.000000e+00 : f32
    %4 = vector.broadcast %cst : f32 to vector<8x256xf32>
    %5 = arith.maximumf %3, %4 : vector<8x256xf32>
    %cst_6 = arith.constant dense<0.000000e+00> : vector<32x256xf32>
    %6 = tpu.matmul %0, %5, %cst_6 {dimension_numbers = #tpu.dot_dimension_numbers<[1], [0], [0], [1], [0, 0, 1, 1], [], []>} : vector<32x8xf32>, vector<8x256xf32>, vector<32x256xf32> -> vector<32x256xf32>
    %7 = vector.broadcast %1 : vector<32x1xf32> to vector<32x256xf32>
    %8 = arith.addf %6, %7 : vector<32x256xf32>
    %c0_7 = arith.constant 0 : index
    %c0_8 = arith.constant 0 : index
    %c0_9 = arith.constant 0 : index
    %9 = vector.load %arg4[%c0_7, %c0_8, %c0_9] : memref<2x32x256xf32, #tpu.memory_space<vmem>>, vector<1x32x256xf32>
    %10 = vector.shape_cast %9 : vector<1x32x256xf32> to vector<32x256xf32>
    %11 = vector.shape_cast %8 : vector<32x256xf32> to vector<1x32x256xf32>
    tpu.vector_store %arg4[%c0_7, %c0_8, %c0_9], %11 {strides = array<i32>} : memref<2x32x256xf32, #tpu.memory_space<vmem>>, vector<1x32x256xf32>,
    %c1 = arith.constant 1 : index
    %c0_10 = arith.constant 0 : index
    %c0_11 = arith.constant 0 : index
    %12 = vector.load %arg1[%c1, %c0_10, %c0_11] : memref<2x8x256xf32, #tpu.memory_space<vmem>>, vector<1x8x256xf32>
    %13 = vector.shape_cast %12 : vector<1x8x256xf32> to vector<8x256xf32>
    %cst_12 = arith.constant 0.000000e+00 : f32
    %14 = vector.broadcast %cst_12 : f32 to vector<8x256xf32>
    %15 = arith.maximumf %13, %14 : vector<8x256xf32>
    %cst_13 = arith.constant dense<0.000000e+00> : vector<32x256xf32>
    %16 = tpu.matmul %0, %15, %cst_13 {dimension_numbers = #tpu.dot_dimension_numbers<[1], [0], [0], [1], [0, 0, 1, 1], [], []>} : vector<32x8xf32>, vector<8x256xf32>, vector<32x256xf32> -> vector<32x256xf32>
    %17 = vector.broadcast %1 : vector<32x1xf32> to vector<32x256xf32>
    %18 = arith.addf %16, %17 : vector<32x256xf32>
    %c1_14 = arith.constant 1 : index
    %c0_15 = arith.constant 0 : index
    %c0_16 = arith.constant 0 : index
    %19 = vector.load %arg4[%c1_14, %c0_15, %c0_16] : memref<2x32x256xf32, #tpu.memory_space<vmem>>, vector<1x32x256xf32>
    %20 = vector.shape_cast %19 : vector<1x32x256xf32> to vector<32x256xf32>
    %21 = vector.shape_cast %18 : vector<32x256xf32> to vector<1x32x256xf32>
    tpu.vector_store %arg4[%c1_14, %c0_15, %c0_16], %21 {strides = array<i32>} : memref<2x32x256xf32, #tpu.memory_space<vmem>>, vector<1x32x256xf32>,
    return
  }
  func.func @transform_0(%arg0: i32) -> (i32, i32, i32) {
    %c0_i32 = arith.constant 0 : i32
    %c0_i32_0 = arith.constant 0 : i32
    %c0_i32_1 = arith.constant 0 : i32
    %c0_i32_2 = arith.constant 0 : i32
    return %c0_i32, %c0_i32_0, %c0_i32_1 : i32, i32, i32
  }
  func.func @transform_1(%arg0: i32) -> (i32, i32) {
    %c0_i32 = arith.constant 0 : i32
    %c0_i32_0 = arith.constant 0 : i32
    %c0_i32_1 = arith.constant 0 : i32
    return %c0_i32, %c0_i32_0 : i32, i32
  }
  func.func @transform_2(%arg0: i32) -> (i32, i32) {
    %c0_i32 = arith.constant 0 : i32
    %c0_i32_0 = arith.constant 0 : i32
    %c0_i32_1 = arith.constant 0 : i32
    return %c0_i32, %c0_i32_0 : i32, i32
  }
  func.func @transform_3(%arg0: i32) -> (i32, i32, i32) {
    %c0_i32 = arith.constant 0 : i32
    %c0_i32_0 = arith.constant 0 : i32
    %c0_i32_1 = arith.constant 0 : i32
    %c0_i32_2 = arith.constant 0 : i32
    return %c0_i32, %c0_i32_0, %c0_i32_1 : i32, i32, i32
  }
}

</mosaic_0001>

<llo_original>
// kernel: tpu_custom_call.1
$region0: #{tpu_custom_call.1}
  #allocation0 [shape = 'u32[]', space=smem, size = 0x4, offset = 0x4, fixed_abs, tag = 'smem constant byte address 0x4 - core index']
  #allocation1 [shape = 'u32[72,128]{1,0:T(1,128)}', space=vmem, size = 0x9000, scoped, tag = 'internal scratch']
  %s0 = inlined_call_operand.vmem [shape: f32[2,8,256], index: 0, kind: input, shape index: {}]
  %s1 = inlined_call_operand.vmem [shape: f32[32,8], index: 1, kind: input, shape index: {}]
  %s2 = inlined_call_operand.vmem [shape: f32[32,1], index: 2, kind: input, shape index: {}]
  %s3 = inlined_call_operand.hbm [shape: f32[2,32,256], index: 3, kind: output, shape index: {}]
  %s4 = sld [smem:[#allocation0]]
  $region22: #{tpu_custom_call.1} parent=0
    _
  %s6 = ssub.s32 1, %s4
  %s7 = scalar_select 0, %s6, %s4
  $region1: #{tpu_custom_call.1} parent=0
    #allocation2 [shape = 'u8[65536]{0}', space=vmem, size = 0x10000, scoped, tag = 'output window, operand 0, single buffered']
    #allocation3 [shape = 's32[1]{0}', space=sflag, size = 0x4, scoped, tag = 'scoped memory for tpu_custom_call.1']
    %8 = vsyncpa [#allocation3], 0
    // Predicated region
    $region2: #{tpu_custom_call.1} parent=1 // pred_check
      _
    $region3: #{tpu_custom_call.1} parent=1 // pred_check_branch
      %10 = sbr.rel (0) target = $region5
    $region4: #{tpu_custom_call.1} parent=1 // pred_region
      _
    $region5: #{tpu_custom_call.1} parent=1 // pred_fallthru
      _
    // Predicated region
    $region6: #{tpu_custom_call.1} parent=1 // pred_check
      _
    $region7: #{tpu_custom_call.1} parent=1 // pred_check_branch
      %12 = sbr.rel (0) target = $region9
    $region8: #{tpu_custom_call.1} parent=1 // pred_region
      _
    $region9: #{tpu_custom_call.1} parent=1 // pred_fallthru
      _
    // Predicated region
    $region10: #{tpu_custom_call.1} parent=1 // pred_check
      _
    $region11: #{tpu_custom_call.1} parent=1 // pred_check_branch
      %14 = sbr.rel (0) target = $region13
    $region12: #{tpu_custom_call.1} parent=1 // pred_region
      _
    $region13: #{tpu_custom_call.1} parent=1 // pred_fallthru
      _
    %v15 = vld [vmem:[%s1] sm:$0xff]
    %v16 = vld [vmem:[%s1 + $0x8] sm:$0xff]
    %v17 = vld [vmem:[%s1 + $0x10] sm:$0xff]
    %v18 = vld [vmem:[%s1 + $0x18] sm:$0xff]
    %v19 = vld [vmem:[%s2] sm:$0xff]
    %v20 = vld [vmem:[%s2 + $0x8] sm:$0xff]
    %v21 = vld [vmem:[%s2 + $0x10] sm:$0xff]
    %v22 = vld [vmem:[%s2 + $0x18] sm:$0xff]
    %v23 = vld [vmem:[%s0] sm:$0xff]
    %v24 = vld [vmem:[%s0 + $0x8] sm:$0xff]
    %v25 = vmax.f32 %v23, 0.0
    %v26 = vmax.f32 %v24, 0.0
    %28 = vset.pattern.permute.xlu0 0
    %29 = vperm.xlu0 %28, %v19
    %v30 = vpop.permute.xlu0 %29
    %33 = vset.pattern.permute.xlu0 0
    %34 = vperm.xlu0 %33, %v20
    %v35 = vpop.permute.xlu0 %34
    %38 = vset.pattern.permute.xlu0 0
    %39 = vperm.xlu0 %38, %v21
    %v40 = vpop.permute.xlu0 %39
    %43 = vset.pattern.permute.xlu0 0
    %44 = vperm.xlu0 %43, %v22
    %v45 = vpop.permute.xlu0 %44
    %vm47 = vcmask 64512
    %v49 = vsel %vm47, %v15, 0
    %v52 = vsel %vm47, %v16, 0
    %v55 = vsel %vm47, %v17, 0
    %v58 = vsel %vm47, %v18, 0
    %60 = vmatpush.msra.mxu0 0.0
    %61 = vmatpush.msra.mxu0 0.0
    %62 = vmatpush.msra.mxu0 0.0
    %63 = vmatpush.msra.mxu0 0.0
    %64 = vmatpush.msra.mxu0 0.0
    %65 = vmatpush.msra.mxu0 0.0
    %66 = vmatpush.msra.mxu0 0.0
    %67 = vmatpush.msra.mxu0 0.0
    %68 = vmatpush.msra.mxu0 0.0
    %69 = vmatpush.msra.mxu0 0.0
    %70 = vmatpush.msra.mxu0 0.0
    %71 = vmatpush.msra.mxu0 0.0
    %72 = vmatpush.msra.mxu0 0.0
    %73 = vmatpush.msra.mxu0 0.0
    %74 = vmatpush.msra.mxu0 0.0
    %75 = vmatpush.msra.mxu0 %v25
    %76 = vmatmul.f32.gmra.mxu0 %v49
    %v77 = vpop.f32.mrf.mxu0
    %v78 = vadd.f32 %v30, %v77
    %79 = vmatmul.f32.gmra.mxu0 %v52
    %v80 = vpop.f32.mrf.mxu0
    %v81 = vadd.f32 %v35, %v80
    %82 = vmatmul.f32.gmra.mxu0 %v55
    %v83 = vpop.f32.mrf.mxu0
    %v84 = vadd.f32 %v40, %v83
    %85 = vmatmul.f32.gmra.mxu0 %v58
    %v86 = vpop.f32.mrf.mxu0
    %v87 = vadd.f32 %v45, %v86
    %88 = vdwg.mxu0
    %89 = vmatpush.msra.mxu0 0.0
    %90 = vmatpush.msra.mxu0 0.0
    %91 = vmatpush.msra.mxu0 0.0
    %92 = vmatpush.msra.mxu0 0.0
    %93 = vmatpush.msra.mxu0 0.0
    %94 = vmatpush.msra.mxu0 0.0
    %95 = vmatpush.msra.mxu0 0.0
    %96 = vmatpush.msra.mxu0 0.0
    %97 = vmatpush.msra.mxu0 0.0
    %98 = vmatpush.msra.mxu0 0.0
    %99 = vmatpush.msra.mxu0 0.0
    %100 = vmatpush.msra.mxu0 0.0
    %101 = vmatpush.msra.mxu0 0.0
    %102 = vmatpush.msra.mxu0 0.0
    %103 = vmatpush.msra.mxu0 0.0
    %104 = vmatpush.msra.mxu0 %v26
    %105 = vmatmul.f32.gmra.mxu0 %v49
    %v106 = vpop.f32.mrf.mxu0
    %v107 = vadd.f32 %v30, %v106
    %108 = vmatmul.f32.gmra.mxu0 %v52
    %v109 = vpop.f32.mrf.mxu0
    %v110 = vadd.f32 %v35, %v109
    %111 = vmatmul.f32.gmra.mxu0 %v55
    %v112 = vpop.f32.mrf.mxu0
    %v113 = vadd.f32 %v40, %v112
    %114 = vmatmul.f32.gmra.mxu0 %v58
    %v115 = vpop.f32.mrf.mxu0
    %v116 = vadd.f32 %v45, %v115
    %117 = vdwg.mxu0
    %118 = vst [vmem:[#allocation2] sm:$0xff] %v78
    %119 = vst [vmem:[#allocation2 + $0x8] sm:$0xff] %v107
    %120 = vst [vmem:[#allocation2 + $0x10] sm:$0xff] %v81
    %121 = vst [vmem:[#allocation2 + $0x18] sm:$0xff] %v110
    %122 = vst [vmem:[#allocation2 + $0x20] sm:$0xff] %v84
    %123 = vst [vmem:[#allocation2 + $0x28] sm:$0xff] %v113
    %124 = vst [vmem:[#allocation2 + $0x30] sm:$0xff] %v87
    %125 = vst [vmem:[#allocation2 + $0x38] sm:$0xff] %v116
    %s126 = scalar_lea.vmem %s0, 16
    %v127 = vld [vmem:[%s126] sm:$0xff]
    %v128 = vld [vmem:[%s126 + $0x8] sm:$0xff]
    %v129 = vmax.f32 %v127, 0.0
    %v130 = vmax.f32 %v128, 0.0
    %131 = vmatpush.msra.mxu0 0.0
    %132 = vmatpush.msra.mxu0 0.0
    %133 = vmatpush.msra.mxu0 0.0
    %134 = vmatpush.msra.mxu0 0.0
    %135 = vmatpush.msra.mxu0 0.0
    %136 = vmatpush.msra.mxu0 0.0
    %137 = vmatpush.msra.mxu0 0.0
    %138 = vmatpush.msra.mxu0 0.0
    %139 = vmatpush.msra.mxu0 0.0
    %140 = vmatpush.msra.mxu0 0.0
    %141 = vmatpush.msra.mxu0 0.0
    %142 = vmatpush.msra.mxu0 0.0
    %143 = vmatpush.msra.mxu0 0.0
    %144 = vmatpush.msra.mxu0 0.0
    %145 = vmatpush.msra.mxu0 0.0
    %146 = vmatpush.msra.mxu0 %v129
    %147 = vmatmul.f32.gmra.mxu0 %v49
    %v148 = vpop.f32.mrf.mxu0
    %v149 = vadd.f32 %v30, %v148
    %150 = vmatmul.f32.gmra.mxu0 %v52
    %v151 = vpop.f32.mrf.mxu0
    %v152 = vadd.f32 %v35, %v151
    %153 = vmatmul.f32.gmra.mxu0 %v55
    %v154 = vpop.f32.mrf.mxu0
    %v155 = vadd.f32 %v40, %v154
    %156 = vmatmul.f32.gmra.mxu0 %v58
    %v157 = vpop.f32.mrf.mxu0
    %v158 = vadd.f32 %v45, %v157
    %159 = vdwg.mxu0
    %160 = vmatpush.msra.mxu0 0.0
    %161 = vmatpush.msra.mxu0 0.0
    %162 = vmatpush.msra.mxu0 0.0
    %163 = vmatpush.msra.mxu0 0.0
    %164 = vmatpush.msra.mxu0 0.0
    %165 = vmatpush.msra.mxu0 0.0
    %166 = vmatpush.msra.mxu0 0.0
    %167 = vmatpush.msra.mxu0 0.0
    %168 = vmatpush.msra.mxu0 0.0
    %169 = vmatpush.msra.mxu0 0.0
    %170 = vmatpush.msra.mxu0 0.0
    %171 = vmatpush.msra.mxu0 0.0
    %172 = vmatpush.msra.mxu0 0.0
    %173 = vmatpush.msra.mxu0 0.0
    %174 = vmatpush.msra.mxu0 0.0
    %175 = vmatpush.msra.mxu0 %v130
    %176 = vmatmul.f32.gmra.mxu0 %v49
    %v177 = vpop.f32.mrf.mxu0
    %v178 = vadd.f32 %v30, %v177
    %179 = vmatmul.f32.gmra.mxu0 %v52
    %v180 = vpop.f32.mrf.mxu0
    %v181 = vadd.f32 %v35, %v180
    %182 = vmatmul.f32.gmra.mxu0 %v55
    %v183 = vpop.f32.mrf.mxu0
    %v184 = vadd.f32 %v40, %v183
    %185 = vmatmul.f32.gmra.mxu0 %v58
    %v186 = vpop.f32.mrf.mxu0
    %v187 = vadd.f32 %v45, %v186
    %188 = vdwg.mxu0
    %s189 = scalar_lea.vmem [#allocation2], 64
    %190 = vst [vmem:[%s189] sm:$0xff] %v149
    %191 = vst [vmem:[%s189 + $0x8] sm:$0xff] %v178
    %192 = vst [vmem:[%s189 + $0x10] sm:$0xff] %v152
    %193 = vst [vmem:[%s189 + $0x18] sm:$0xff] %v181
    %194 = vst [vmem:[%s189 + $0x20] sm:$0xff] %v155
    %195 = vst [vmem:[%s189 + $0x28] sm:$0xff] %v184
    %196 = vst [vmem:[%s189 + $0x30] sm:$0xff] %v158
    %197 = vst [vmem:[%s189 + $0x38] sm:$0xff] %v187
    // Predicated region
    $region14: #{tpu_custom_call.1} parent=1 // pred_check
      _
    $region15: #{tpu_custom_call.1} parent=1 // pred_check_branch
      %199 = sbr.rel (0) target = $region17
    $region16: #{tpu_custom_call.1} parent=1 // pred_region
      %201 = vsyncadd [#allocation3], 0
      %s202 = sshll.u32 [#allocation2], 4
      %s203 = int_to_ptr.vmem [resolvable:$true] %s202
      %s204 = sshll.u32 %s3, 4
      %s205 = int_to_ptr.hbm [resolvable:$true] %s204
      %210 = dma.vmem_to_hbm [thread:$0]  %s203, 2048, %s205, [#allocation3], 256, 256, 16
    $region17: #{tpu_custom_call.1} parent=1 // pred_fallthru
      _
    // Predicated region
    $region18: #{tpu_custom_call.1} parent=1 // pred_check
      _
    $region19: #{tpu_custom_call.1} parent=1 // pred_check_branch
      %212 = sbr.rel (0) target = $region21
    $region20: #{tpu_custom_call.1} parent=1 // pred_region
      %214 = dma.done [#allocation3], 2048
    $region21: #{tpu_custom_call.1} parent=1 // pred_fallthru
      _
    %215 = vsyncpa [#allocation3], 1

</llo_original>
